<compile_context>
chip_gen: v6e
topology: v6e:2x2x1
jax: 0.10.0
libtpu: 0.0.40
codegen_flags: <defaults>
</compile_context>

<pallas_src>
import functools

import jax
import jax.numpy as jnp
from jax.experimental import pallas as pl
from jax.experimental.pallas import tpu as pltpu


_VMEM_LIMIT = 32 * 1024 * 1024   # explicit scoped-VMEM cap, safe on v5e/v6e/v7x


def _pick_tile(m, cap=2048):
    """Largest lane-dense tile (multiple of 128) that divides m; m itself if small."""
    if m <= cap:
        return m
    for t in range(cap, 127, -128):
        if m % t == 0:
            return t
    return m


# ----------------------------------------------------------------------------
# Conv3d(k=3, s=2, p=1) + ReLU as a transposed, lane-dense Pallas matmul
# ----------------------------------------------------------------------------
def _conv_mm_kernel(p_ref, w_ref, b_ref, o_ref):
    """o[0] = relu(W @ patches + b).

    W: (C_out, K) bf16, patches: (1, K, TM) bf16, b: (C_out, 1) f32,
    o: (1, C_out, TM) bf16.  bf16 MXU inputs, f32 accumulation, f32 epilogue.
    """
    acc = jnp.dot(w_ref[...], p_ref[0],
                  preferred_element_type=jnp.float32)          # (C_out, TM)
    acc = jnp.maximum(acc + b_ref[...], 0.0)                   # bias + ReLU in f32
    o_ref[0] = acc.astype(o_ref.dtype)


def conv3d_relu_pallas(x, w_packed, bias_col, *, out_dims):
    """Conv3d(kernel=3, stride=2, padding=1) + ReLU.

    x        : (B, C_in, D, H, W) bf16, NCDHW.
    w_packed : (C_out, 27*C_in) bf16, columns ordered (kd, kh, kw, ci).
    bias_col : (C_out, 1) f32.
    Returns  : (B, C_out, Do, Ho, Wo) bf16, NCDHW (no transpose needed).
    """
    B, C, D, H, W = x.shape
    Do, Ho, Wo = out_dims
    C_out, K = w_packed.shape
    M = Do * Ho * Wo

    # ---- im2col glue (plain JAX): tap-major, transposed, bf16 -------------
    # TODO(synk): candidate for full in-kernel fusion via strided pl.ds reads.
    xp = jnp.pad(x, ((0, 0), (0, 0), (1, 1), (1, 1), (1, 1)))
    cols = []
    for kd in range(3):
        for kh in range(3):
            for kw in range(3):
                sl = xp[:, :,
                        kd:kd + 2 * Do:2,
                        kh:kh + 2 * Ho:2,
                        kw:kw + 2 * Wo:2]                      # (B, C, Do, Ho, Wo)
                cols.append(sl.reshape(B, C, M))
    patches_t = jnp.concatenate(cols, axis=1)                   # (B, 27*C, M)

    tm = _pick_tile(M)
    grid = (B, M // tm)

    out = pl.pallas_call(
        _conv_mm_kernel,
        out_shape=jax.ShapeDtypeStruct((B, C_out, M), jnp.bfloat16),
        grid=grid,
        in_specs=[
            pl.BlockSpec((1, K, tm), lambda b, m: (b, 0, m)),
            pl.BlockSpec((C_out, K), lambda b, m: (0, 0)),
            pl.BlockSpec((C_out, 1), lambda b, m: (0, 0)),
        ],
        out_specs=pl.BlockSpec((1, C_out, tm), lambda b, m: (b, 0, m)),
        compiler_params=pltpu.CompilerParams(
            dimension_semantics=("parallel", "parallel"),
            vmem_limit_bytes=_VMEM_LIMIT),
    )(patches_t, w_packed, bias_col)

    return out.reshape(B, C_out, Do, Ho, Wo)


# ----------------------------------------------------------------------------
# Fused fc -> [z_mean | z_log_var] -> reparameterized sample
# ----------------------------------------------------------------------------
def _fc_head_kernel(x_ref, wfc_ref, bfc_ref, wh_ref, bh_ref, eps_ref,
                    stats_ref, z_ref, *, latent):
    """h = x @ W_fc + b; [mean|logvar] = h @ W_head + b; z = mean + exp(lv/2)*eps.

    h stays in registers/VMEM — no HBM round-trip between fc and the VAE head.
    """
    h = jnp.dot(x_ref[...], wfc_ref[...],
                preferred_element_type=jnp.float32) + bfc_ref[...]
    stats = jnp.dot(h.astype(jnp.bfloat16), wh_ref[...],
                    preferred_element_type=jnp.float32) + bh_ref[...]
    stats_ref[...] = stats
    z_mean = stats[:, :latent]
    z_log_var = stats[:, latent:]
    z_ref[...] = z_mean + jnp.exp(z_log_var * 0.5) * eps_ref[...]


def fc_head_pallas(x_flat, wfc, bfc_row, wh, bh_row, eps, *, latent):
    B, F = x_flat.shape
    H = wfc.shape[1]
    kern = functools.partial(_fc_head_kernel, latent=latent)
    out_shape = (jax.ShapeDtypeStruct((B, 2 * latent), jnp.float32),
                 jax.ShapeDtypeStruct((B, latent), jnp.float32))

    tb = 0
    if B > 256:                      # keep VMEM bounded by the tile for big B
        for t in (512, 256, 128, 64, 32, 16, 8):
            if B % t == 0:
                tb = t
                break

    if tb:
        stats, z = pl.pallas_call(
            kern,
            out_shape=out_shape,
            grid=(B // tb,),
            in_specs=[
                pl.BlockSpec((tb, F), lambda i: (i, 0)),
                pl.BlockSpec((F, H), lambda i: (0, 0)),
                pl.BlockSpec((1, H), lambda i: (0, 0)),
                pl.BlockSpec((H, 2 * latent), lambda i: (0, 0)),
                pl.BlockSpec((1, 2 * latent), lambda i: (0, 0)),
                pl.BlockSpec((tb, latent), lambda i: (i, 0)),
            ],
            out_specs=(pl.BlockSpec((tb, 2 * latent), lambda i: (i, 0)),
                       pl.BlockSpec((tb, latent), lambda i: (i, 0))),
            compiler_params=pltpu.CompilerParams(
                dimension_semantics=("parallel",),
                vmem_limit_bytes=_VMEM_LIMIT),
        )(x_flat, wfc, bfc_row, wh, bh_row, eps)
    else:
        vmem = pl.BlockSpec(memory_space=pltpu.MemorySpace.VMEM)
        stats, z = pl.pallas_call(
            kern,
            out_shape=out_shape,
            in_specs=[vmem] * 6,
            out_specs=(vmem, vmem),
            compiler_params=pltpu.CompilerParams(vmem_limit_bytes=_VMEM_LIMIT),
        )(x_flat, wfc, bfc_row, wh, bh_row, eps)

    return stats[:, :latent], stats[:, latent:], z


# ----------------------------------------------------------------------------
# Parameter init (PyTorch-default-style), pre-packed into kernel layouts
# ----------------------------------------------------------------------------
def init_encoder_params(key, input_size, channels, hidden_size, latent_size):
    params = {"conv": []}
    in_c = 1
    d, h, w = input_size
    for c in channels:
        key, kw_, kb_ = jax.random.split(key, 3)
        fan_in = in_c * 27
        bound = 1.0 / float(fan_in) ** 0.5
        w_t = jax.random.uniform(kw_, (c, in_c, 3, 3, 3), jnp.float32, -bound, bound)
        b_t = jax.random.uniform(kb_, (c,), jnp.float32, -bound, bound)
        d, h, w = d // 2, h // 2, w // 2
        params["conv"].append({
            # packed once for the kernel: (C_out, 27*C_in) bf16, cols (kd,kh,kw,ci)
            "w_packed": w_t.transpose(0, 2, 3, 4, 1)
                           .reshape(c, 27 * in_c).astype(jnp.bfloat16),
            "b_col": b_t.reshape(c, 1),             # f32, lane-broadcast in kernel
            "out_dims": (d, h, w),
        })
        in_c = c

    fc_in = (input_size[0] * input_size[1] * input_size[2] * channels[-1]) \
        // (8 ** len(channels))

    def linear_init(key, fan_in, fan_out):
        kw_, kb_ = jax.random.split(key)
        bound = 1.0 / float(fan_in) ** 0.5
        w_ = jax.random.uniform(kw_, (fan_in, fan_out), jnp.float32, -bound, bound)
        b_ = jax.random.uniform(kb_, (fan_out,), jnp.float32, -bound, bound)
        return w_, b_

    key, k1, k2, k3 = jax.random.split(key, 4)
    w_fc, b_fc = linear_init(k1, fc_in, hidden_size)
    w_m, b_m = linear_init(k2, hidden_size, latent_size)
    w_v, b_v = linear_init(k3, hidden_size, latent_size)
    params["fc_w"] = w_fc.astype(jnp.bfloat16)                  # (F, H), x @ w + b
    params["fc_b"] = b_fc.reshape(1, hidden_size)               # f32
    # concatenated head: one (H, 2L) matmul produces [z_mean | z_log_var]
    params["head_w"] = jnp.concatenate([w_m, w_v], axis=1).astype(jnp.bfloat16)
    params["head_b"] = jnp.concatenate([b_m, b_v]).reshape(1, 2 * latent_size)
    params["latent"] = latent_size
    return params


# ----------------------------------------------------------------------------
# Encoder forward
# ----------------------------------------------------------------------------
def encoder_forward(params, x, eps):
    """x: (B, 1, D, H, W) f32 NCDHW; eps: (B, latent) f32 ~ N(0,1)."""
    x = x.astype(jnp.bfloat16)                 # activations travel HBM in bf16
    for layer in params["conv"]:
        x = conv3d_relu_pallas(x, layer["w_packed"], layer["b_col"],
                               out_dims=layer["out_dims"])
    B = x.shape[0]
    x_flat = x.reshape(B, -1)                  # NCDHW flatten == torch .view(B,-1)
    return fc_head_pallas(x_flat, params["fc_w"], params["fc_b"],
                          params["head_w"], params["head_b"], eps,
                          latent=params["latent"])


# ----------------------------------------------------------------------------
# Pure-JAX reference mirroring the kernel math (incl. bf16 input rounding)
# ----------------------------------------------------------------------------
def encoder_forward_ref(params, x, eps):
    f32 = jnp.float32
    x = x.astype(jnp.bfloat16)
    for layer in params["conv"]:
        B, C = x.shape[0], x.shape[1]
        Do, Ho, Wo = layer["out_dims"]
        M = Do * Ho * Wo
        xp = jnp.pad(x, ((0, 0), (0, 0), (1, 1), (1, 1), (1, 1)))
        cols = []
        for kd in range(3):
            for kh in range(3):
                for kw in range(3):
                    sl = xp[:, :,
                            kd:kd + 2 * Do:2,
                            kh:kh + 2 * Ho:2,
                            kw:kw + 2 * Wo:2]
                    cols.append(sl.reshape(B, C, M))
        p = jnp.concatenate(cols, axis=1).astype(f32)           # (B, 27C, M)
        wmat = layer["w_packed"].astype(f32)                    # (C_out, 27C)
        out = jnp.einsum("ok,bkm->bom", wmat, p) + layer["b_col"][None]
        x = jnp.maximum(out, 0.0).astype(jnp.bfloat16).reshape(
            B, wmat.shape[0], Do, Ho, Wo)
    B = x.shape[0]
    xf = x.reshape(B, -1).astype(f32)
    h = xf @ params["fc_w"].astype(f32) + params["fc_b"]
    stats = (h.astype(jnp.bfloat16).astype(f32) @ params["head_w"].astype(f32)
             + params["head_b"])
    L = params["latent"]
    z_mean, z_log_var = stats[:, :L], stats[:, L:]
    z = z_mean + jnp.exp(z_log_var / 2.0) * eps
    return z_mean, z_log_var, z


if __name__ == "__main__":
    # Small config consistent with the module (input_size divisible by 2^len(channels)).
    input_size = (16, 16, 16)
    channels = (4, 8)
    hidden_size = 32
    latent_size = 8
    batch = 2

    key = jax.random.PRNGKey(0)
    key, k_params, k_x, k_eps = jax.random.split(key, 4)

    params = init_encoder_params(k_params, input_size, channels,
                                 hidden_size, latent_size)
    x = jax.random.normal(k_x, (batch, 1) + tuple(input_size), dtype=jnp.float32)
    eps = jax.random.normal(k_eps, (batch, latent_size), dtype=jnp.float32)

    fwd = jax.jit(lambda xx, ee: encoder_forward(params, xx, ee))
    z_mean, z_log_var, z = jax.block_until_ready(fwd(x, eps))

    zm_ref, zv_ref, z_ref = encoder_forward_ref(params, x, eps)
    assert z_mean.shape == (batch, latent_size)
    assert z_log_var.shape == (batch, latent_size)
    assert z.shape == (batch, latent_size)
    assert jnp.allclose(z_mean, zm_ref, atol=2e-3, rtol=2e-3)
    assert jnp.allclose(z_log_var, zv_ref, atol=2e-3, rtol=2e-3)
    assert jnp.allclose(z, z_ref, atol=2e-3, rtol=2e-3)

    print("KERNEL_OK")
</pallas_src>

<mosaic_0001>
module attributes {stable_mosaic.version = 11 : i64} {
  func.func @_conv_mm_kernel(%arg0: i32, %arg1: i32, %arg2: memref<1x27x512xbf16, #tpu.memory_space<vmem>>, %arg3: memref<4x27xbf16, #tpu.memory_space<vmem>>, %arg4: memref<4x1xf32, #tpu.memory_space<vmem>>, %arg5: memref<1x4x512xbf16, #tpu.memory_space<vmem>>) attributes {dimension_semantics = [#tpu.dimension_semantics<parallel>, #tpu.dimension_semantics<parallel>], iteration_bounds = array<i64: 2, 1>, scalar_prefetch = 0 : i64, scratch_operands = 0 : i64, tpu.core_type = #tpu.core_type<tc>, window_params = [{transform_indices = @transform_0, window_bounds = array<i64: 1, 27, 512>}, {pipeline_mode = #tpu.pipeline_mode<synchronous>, transform_indices = @transform_1, window_bounds = array<i64: 4, 27>}, {pipeline_mode = #tpu.pipeline_mode<synchronous>, transform_indices = @transform_2, window_bounds = array<i64: 4, 1>}, {transform_indices = @transform_3, window_bounds = array<i64: 1, 4, 512>}]} {
    %c0 = arith.constant 0 : index
    %c0_0 = arith.constant 0 : index
    %0 = vector.load %arg3[%c0, %c0_0] : memref<4x27xbf16, #tpu.memory_space<vmem>>, vector<4x27xbf16>
    %c0_1 = arith.constant 0 : index
    %c0_2 = arith.constant 0 : index
    %c0_3 = arith.constant 0 : index
    %1 = vector.load %arg2[%c0_1, %c0_2, %c0_3] : memref<1x27x512xbf16, #tpu.memory_space<vmem>>, vector<1x27x512xbf16>
    %2 = vector.shape_cast %1 : vector<1x27x512xbf16> to vector<27x512xbf16>
    %cst = arith.constant dense<0.000000e+00> : vector<4x512xf32>
    %3 = tpu.matmul %0, %2, %cst {dimension_numbers = #tpu.dot_dimension_numbers<[1], [0], [0], [1], [0, 0, 1, 1], [], []>} : vector<4x27xbf16>, vector<27x512xbf16>, vector<4x512xf32> -> vector<4x512xf32>
    %c0_4 = arith.constant 0 : index
    %c0_5 = arith.constant 0 : index
    %4 = vector.load %arg4[%c0_4, %c0_5] : memref<4x1xf32, #tpu.memory_space<vmem>>, vector<4x1xf32>
    %5 = vector.broadcast %4 : vector<4x1xf32> to vector<4x512xf32>
    %6 = arith.addf %3, %5 : vector<4x512xf32>
    %cst_6 = arith.constant 0.000000e+00 : f32
    %7 = vector.broadcast %cst_6 : f32 to vector<4x512xf32>
    %8 = arith.maximumf %6, %7 : vector<4x512xf32>
    %9 = arith.truncf %8 : vector<4x512xf32> to vector<4x512xbf16>
    %c0_7 = arith.constant 0 : index
    %c0_8 = arith.constant 0 : index
    %c0_9 = arith.constant 0 : index
    %10 = vector.load %arg5[%c0_7, %c0_8, %c0_9] : memref<1x4x512xbf16, #tpu.memory_space<vmem>>, vector<1x4x512xbf16>
    %11 = vector.shape_cast %10 : vector<1x4x512xbf16> to vector<4x512xbf16>
    %12 = vector.shape_cast %9 : vector<4x512xbf16> to vector<1x4x512xbf16>
    tpu.vector_store %arg5[%c0_7, %c0_8, %c0_9], %12 {strides = array<i32>} : memref<1x4x512xbf16, #tpu.memory_space<vmem>>, vector<1x4x512xbf16>,
    return
  }
  func.func @transform_0(%arg0: i32, %arg1: i32) -> (i32, i32, i32) {
    %c0_i32 = arith.constant 0 : i32
    %c0_i32_0 = arith.constant 0 : i32
    return %arg0, %c0_i32, %arg1 : i32, i32, i32
  }
  func.func @transform_1(%arg0: i32, %arg1: i32) -> (i32, i32) {
    %c0_i32 = arith.constant 0 : i32
    %c0_i32_0 = arith.constant 0 : i32
    %c0_i32_1 = arith.constant 0 : i32
    return %c0_i32, %c0_i32_0 : i32, i32
  }
  func.func @transform_2(%arg0: i32, %arg1: i32) -> (i32, i32) {
    %c0_i32 = arith.constant 0 : i32
    %c0_i32_0 = arith.constant 0 : i32
    %c0_i32_1 = arith.constant 0 : i32
    return %c0_i32, %c0_i32_0 : i32, i32
  }
  func.func @transform_3(%arg0: i32, %arg1: i32) -> (i32, i32, i32) {
    %c0_i32 = arith.constant 0 : i32
    %c0_i32_0 = arith.constant 0 : i32
    return %arg0, %c0_i32, %arg1 : i32, i32, i32
  }
}

module attributes {stable_mosaic.version = 11 : i64} {
  func.func @_fc_head_kernel(%arg0: memref<2x512xbf16, #tpu.memory_space<vmem>>, %arg1: memref<512x32xbf16, #tpu.memory_space<vmem>>, %arg2: memref<1x32xf32, #tpu.memory_space<vmem>>, %arg3: memref<32x16xbf16, #tpu.memory_space<vmem>>, %arg4: memref<1x16xf32, #tpu.memory_space<vmem>>, %arg5: memref<2x8xf32, #tpu.memory_space<vmem>>, %arg6: memref<2x16xf32, #tpu.memory_space<vmem>>, %arg7: memref<2x8xf32, #tpu.memory_space<vmem>>) attributes {dimension_semantics = [], scalar_prefetch = 0 : i64, scratch_operands = 0 : i64, tpu.core_type = #tpu.core_type<tc>} {
    %c0 = arith.constant 0 : index
    %c0_0 = arith.constant 0 : index
    %0 = vector.load %arg0[%c0, %c0_0] : memref<2x512xbf16, #tpu.memory_space<vmem>>, vector<2x512xbf16>
    %c0_1 = arith.constant 0 : index
    %c0_2 = arith.constant 0 : index
    %1 = vector.load %arg1[%c0_1, %c0_2] : memref<512x32xbf16, #tpu.memory_space<vmem>>, vector<512x32xbf16>
    %cst = arith.constant dense<0.000000e+00> : vector<2x32xf32>
    %2 = tpu.matmul %0, %1, %cst {dimension_numbers = #tpu.dot_dimension_numbers<[1], [0], [0], [1], [0, 0, 1, 1], [], []>} : vector<2x512xbf16>, vector<512x32xbf16>, vector<2x32xf32> -> vector<2x32xf32>
    %c0_3 = arith.constant 0 : index
    %c0_4 = arith.constant 0 : index
    %3 = vector.load %arg2[%c0_3, %c0_4] : memref<1x32xf32, #tpu.memory_space<vmem>>, vector<1x32xf32>
    %4 = vector.broadcast %3 : vector<1x32xf32> to vector<2x32xf32>
    %5 = arith.addf %2, %4 : vector<2x32xf32>
    %6 = arith.truncf %5 : vector<2x32xf32> to vector<2x32xbf16>
    %c0_5 = arith.constant 0 : index
    %c0_6 = arith.constant 0 : index
    %7 = vector.load %arg3[%c0_5, %c0_6] : memref<32x16xbf16, #tpu.memory_space<vmem>>, vector<32x16xbf16>
    %cst_7 = arith.constant dense<0.000000e+00> : vector<2x16xf32>
    %8 = tpu.matmul %6, %7, %cst_7 {dimension_numbers = #tpu.dot_dimension_numbers<[1], [0], [0], [1], [0, 0, 1, 1], [], []>} : vector<2x32xbf16>, vector<32x16xbf16>, vector<2x16xf32> -> vector<2x16xf32>
    %c0_8 = arith.constant 0 : index
    %c0_9 = arith.constant 0 : index
    %9 = vector.load %arg4[%c0_8, %c0_9] : memref<1x16xf32, #tpu.memory_space<vmem>>, vector<1x16xf32>
    %10 = vector.broadcast %9 : vector<1x16xf32> to vector<2x16xf32>
    %11 = arith.addf %8, %10 : vector<2x16xf32>
    %c0_10 = arith.constant 0 : index
    %c0_11 = arith.constant 0 : index
    %12 = vector.load %arg6[%c0_10, %c0_11] : memref<2x16xf32, #tpu.memory_space<vmem>>, vector<2x16xf32>
    tpu.vector_store %arg6[%c0_10, %c0_11], %11 {strides = array<i32>} : memref<2x16xf32, #tpu.memory_space<vmem>>, vector<2x16xf32>,
    %13 = vector.extract_strided_slice %11 {offsets = [0, 0], sizes = [2, 8], strides = [1, 1]} : vector<2x16xf32> to vector<2x8xf32>
    %14 = vector.extract_strided_slice %11 {offsets = [0, 8], sizes = [2, 8], strides = [1, 1]} : vector<2x16xf32> to vector<2x8xf32>
    %cst_12 = arith.constant 5.000000e-01 : f32
    %15 = vector.broadcast %cst_12 : f32 to vector<2x8xf32>
    %16 = arith.mulf %14, %15 : vector<2x8xf32>
    %17 = math.exp %16 : vector<2x8xf32>
    %c0_13 = arith.constant 0 : index
    %c0_14 = arith.constant 0 : index
    %18 = vector.load %arg5[%c0_13, %c0_14] : memref<2x8xf32, #tpu.memory_space<vmem>>, vector<2x8xf32>
    %19 = arith.mulf %17, %18 : vector<2x8xf32>
    %20 = arith.addf %13, %19 : vector<2x8xf32>
    %c0_15 = arith.constant 0 : index
    %c0_16 = arith.constant 0 : index
    %21 = vector.load %arg7[%c0_15, %c0_16] : memref<2x8xf32, #tpu.memory_space<vmem>>, vector<2x8xf32>
    tpu.vector_store %arg7[%c0_15, %c0_16], %20 {strides = array<i32>} : memref<2x8xf32, #tpu.memory_space<vmem>>, vector<2x8xf32>,
    return
  }
}

module attributes {stable_mosaic.version = 11 : i64} {
  func.func @_conv_mm_kernel(%arg0: i32, %arg1: i32, %arg2: memref<1x108x64xbf16, #tpu.memory_space<vmem>>, %arg3: memref<8x108xbf16, #tpu.memory_space<vmem>>, %arg4: memref<8x1xf32, #tpu.memory_space<vmem>>, %arg5: memref<1x8x64xbf16, #tpu.memory_space<vmem>>) attributes {dimension_semantics = [#tpu.dimension_semantics<parallel>, #tpu.dimension_semantics<parallel>], iteration_bounds = array<i64: 2, 1>, scalar_prefetch = 0 : i64, scratch_operands = 0 : i64, tpu.core_type = #tpu.core_type<tc>, window_params = [{transform_indices = @transform_0, window_bounds = array<i64: 1, 108, 64>}, {pipeline_mode = #tpu.pipeline_mode<synchronous>, transform_indices = @transform_1, window_bounds = array<i64: 8, 108>}, {pipeline_mode = #tpu.pipeline_mode<synchronous>, transform_indices = @transform_2, window_bounds = array<i64: 8, 1>}, {transform_indices = @transform_3, window_bounds = array<i64: 1, 8, 64>}]} {
    %c0 = arith.constant 0 : index
    %c0_0 = arith.constant 0 : index
    %0 = vector.load %arg3[%c0, %c0_0] : memref<8x108xbf16, #tpu.memory_space<vmem>>, vector<8x108xbf16>
    %c0_1 = arith.constant 0 : index
    %c0_2 = arith.constant 0 : index
    %c0_3 = arith.constant 0 : index
    %1 = vector.load %arg2[%c0_1, %c0_2, %c0_3] : memref<1x108x64xbf16, #tpu.memory_space<vmem>>, vector<1x108x64xbf16>
    %2 = vector.shape_cast %1 : vector<1x108x64xbf16> to vector<108x64xbf16>
    %cst = arith.constant dense<0.000000e+00> : vector<8x64xf32>
    %3 = tpu.matmul %0, %2, %cst {dimension_numbers = #tpu.dot_dimension_numbers<[1], [0], [0], [1], [0, 0, 1, 1], [], []>} : vector<8x108xbf16>, vector<108x64xbf16>, vector<8x64xf32> -> vector<8x64xf32>
    %c0_4 = arith.constant 0 : index
    %c0_5 = arith.constant 0 : index
    %4 = vector.load %arg4[%c0_4, %c0_5] : memref<8x1xf32, #tpu.memory_space<vmem>>, vector<8x1xf32>
    %5 = vector.broadcast %4 : vector<8x1xf32> to vector<8x64xf32>
    %6 = arith.addf %3, %5 : vector<8x64xf32>
    %cst_6 = arith.constant 0.000000e+00 : f32
    %7 = vector.broadcast %cst_6 : f32 to vector<8x64xf32>
    %8 = arith.maximumf %6, %7 : vector<8x64xf32>
    %9 = arith.truncf %8 : vector<8x64xf32> to vector<8x64xbf16>
    %c0_7 = arith.constant 0 : index
    %c0_8 = arith.constant 0 : index
    %c0_9 = arith.constant 0 : index
    %10 = vector.load %arg5[%c0_7, %c0_8, %c0_9] : memref<1x8x64xbf16, #tpu.memory_space<vmem>>, vector<1x8x64xbf16>
    %11 = vector.shape_cast %10 : vector<1x8x64xbf16> to vector<8x64xbf16>
    %12 = vector.shape_cast %9 : vector<8x64xbf16> to vector<1x8x64xbf16>
    tpu.vector_store %arg5[%c0_7, %c0_8, %c0_9], %12 {strides = array<i32>} : memref<1x8x64xbf16, #tpu.memory_space<vmem>>, vector<1x8x64xbf16>,
    return
  }
  func.func @transform_0(%arg0: i32, %arg1: i32) -> (i32, i32, i32) {
    %c0_i32 = arith.constant 0 : i32
    %c0_i32_0 = arith.constant 0 : i32
    return %arg0, %c0_i32, %arg1 : i32, i32, i32
  }
  func.func @transform_1(%arg0: i32, %arg1: i32) -> (i32, i32) {
    %c0_i32 = arith.constant 0 : i32
    %c0_i32_0 = arith.constant 0 : i32
    %c0_i32_1 = arith.constant 0 : i32
    return %c0_i32, %c0_i32_0 : i32, i32
  }
  func.func @transform_2(%arg0: i32, %arg1: i32) -> (i32, i32) {
    %c0_i32 = arith.constant 0 : i32
    %c0_i32_0 = arith.constant 0 : i32
    %c0_i32_1 = arith.constant 0 : i32
    return %c0_i32, %c0_i32_0 : i32, i32
  }
  func.func @transform_3(%arg0: i32, %arg1: i32) -> (i32, i32, i32) {
    %c0_i32 = arith.constant 0 : i32
    %c0_i32_0 = arith.constant 0 : i32
    return %arg0, %c0_i32, %arg1 : i32, i32, i32
  }
}

</mosaic_0001>

<llo_original>
// kernel: _lambda_.3
$region0: #{_lambda_.3}
  #allocation0 [shape = 'u32[]', space=smem, size = 0x4, offset = 0x4, fixed_abs, tag = 'smem constant byte address 0x4 - core index']
  #allocation1 [shape = 'u32[144,128]{1,0:T(1,128)}', space=vmem, size = 0x12000, scoped, tag = 'internal scratch']
  %s0 = inlined_call_operand.vmem [shape: bf16[2,27,512], index: 0, kind: input, shape index: {}]
  %s1 = inlined_call_operand.vmem [shape: bf16[4,27], index: 1, kind: input, shape index: {}]
  %s2 = inlined_call_operand.vmem [shape: f32[4,1], index: 2, kind: input, shape index: {}]
  %s3 = inlined_call_operand.vmem [shape: bf16[2,4,512], index: 3, kind: output, shape index: {}]
  %s4 = sld [smem:[#allocation0]]
  $region45: #{_lambda_.3} parent=0
    _
  %s6 = ssub.s32 1, %s4
  %s7 = scalar_select 0, %s6, %s4
  loop: start=0, step=1, limit=4
  $region2: #{_lambda_.3} parent=0 // loop_pre_header
    _
  $region3: #{_lambda_.3} parent=0 // loop_header
    %s9 = sphi 0, %s13
    %p10 = scmp.ge.s32.totalorder %s9, 4
    %s16 = sphi 0, %s28
    %s17 = sphi 0, %s24
    %s18 = sphi 0, %s16
    %s19 = sphi 0, %s17
    %s20 = sphi 0, %s18
    %s21 = sphi 0, %s19
    %s33 = sphi 0, %s35
    %s36 = sphi 0, %s33
    %s37 = sphi 0, %s36
    %s53 = sphi 0, %s37
    %s57 = sphi 0, %s57
    %s59 = sphi 0, %s57
    %s60 = sphi 0, %s59
    %s74 = sphi 0, %s60
    %s78 = sphi 0, %s78
    %s80 = sphi 0, %s78
    %s81 = sphi 0, %s80
    %s95 = sphi 0, %s81
    %s103 = sphi 0, %s105
    %s106 = sphi 0, %s103
    %s107 = sphi 0, %s106
    %s123 = sphi 0, %s107
  $region4: #{_lambda_.3} parent=0 // loop_header_branch
    %12 = sbr.rel (%p10) target = $region8
  $region5: #{_lambda_.3} parent=0 // loop_body
    %s14 = ssub.s32 %s9, 1
    %s15 = ssub.s32 %s9, 2
    %s22 = sadd.s32 1, %s17
    %p23 = scmp.ge.s32.totalorder %s22, 1
    %s24 = scalar_select %p23, 0, %s22
    %s25 = sadd.s32 1, %s16
    %s26 = scalar_select %p23, %s25, %s16
    %p27 = scmp.ge.s32.totalorder %s26, 2
    %s28 = scalar_select %p27, 0, %s26
    %s29 = ssub.s32 %s16, %s28
    %s30 = ssub.s32 %s17, %s24
    %s31 = sor.u32 %s29, %s30
    %p32 = scmp.eq.s32.totalorder %s31, 0
    %s34 = sadd.s32 %s33, 1
    %s35 = scalar_select %p32, %s33, %s34
    %p38 = pneg %p32
    %p39 = scmp.eq.s32.totalorder %s9, 1
    %p40 = por %p38, %p39
    %p41 = scmp.ne.s32.totalorder %s33, %s36
    %p42 = scmp.eq.s32.totalorder %s9, 0
    %p43 = por %p41, %p42
    %p44 = scmp.ne.s32.totalorder %s33, %s36
    %p45 = scmp.eq.s32.totalorder %s14, 1
    %p46 = por %p44, %p45
    %p47 = scmp.ne.s32.totalorder %s36, %s37
    %p48 = scmp.eq.s32.totalorder %s14, 0
    %p49 = por %p47, %p48
    %p50 = scmp.ne.s32.totalorder %s36, %s37
    %p51 = scmp.eq.s32.totalorder %s15, 1
    %p52 = por %p50, %p51
    %p54 = scmp.ne.s32.totalorder %s37, %s53
    %p55 = scmp.eq.s32.totalorder %s15, 0
    %p56 = por %p54, %p55
    %s58 = sadd.s32 %s57, 1
    %p61 = scmp.eq.s32.totalorder %s9, 1
    %p62 = scmp.ne.s32.totalorder %s57, %s59
    %p63 = scmp.eq.s32.totalorder %s9, 0
    %p64 = por %p62, %p63
    %p65 = scmp.ne.s32.totalorder %s57, %s59
    %p66 = scmp.eq.s32.totalorder %s14, 1
    %p67 = por %p65, %p66
    %p68 = scmp.ne.s32.totalorder %s59, %s60
    %p69 = scmp.eq.s32.totalorder %s14, 0
    %p70 = por %p68, %p69
    %p71 = scmp.ne.s32.totalorder %s59, %s60
    %p72 = scmp.eq.s32.totalorder %s15, 1
    %p73 = por %p71, %p72
    %p75 = scmp.ne.s32.totalorder %s60, %s74
    %p76 = scmp.eq.s32.totalorder %s15, 0
    %p77 = por %p75, %p76
    %s79 = sadd.s32 %s78, 1
    %p82 = scmp.eq.s32.totalorder %s9, 1
    %p83 = scmp.ne.s32.totalorder %s78, %s80
    %p84 = scmp.eq.s32.totalorder %s9, 0
    %p85 = por %p83, %p84
    %p86 = scmp.ne.s32.totalorder %s78, %s80
    %p87 = scmp.eq.s32.totalorder %s14, 1
    %p88 = por %p86, %p87
    %p89 = scmp.ne.s32.totalorder %s80, %s81
    %p90 = scmp.eq.s32.totalorder %s14, 0
    %p91 = por %p89, %p90
    %p92 = scmp.ne.s32.totalorder %s80, %s81
    %p93 = scmp.eq.s32.totalorder %s15, 1
    %p94 = por %p92, %p93
    %p96 = scmp.ne.s32.totalorder %s81, %s95
    %p97 = scmp.eq.s32.totalorder %s15, 0
    %p98 = por %p96, %p97
    %s99 = ssub.s32 %s16, %s28
    %s100 = ssub.s32 %s17, %s24
    %s101 = sor.u32 %s99, %s100
    %p102 = scmp.eq.s32.totalorder %s101, 0
    %s104 = sadd.s32 %s103, 1
    %s105 = scalar_select %p102, %s103, %s104
    %p108 = pneg %p102
    %p109 = scmp.eq.s32.totalorder %s9, 1
    %p110 = por %p108, %p109
    %p111 = scmp.ne.s32.totalorder %s103, %s106
    %p112 = scmp.eq.s32.totalorder %s9, 0
    %p113 = por %p111, %p112
    %p114 = scmp.ne.s32.totalorder %s103, %s106
    %p115 = scmp.eq.s32.totalorder %s14, 1
    %p116 = por %p114, %p115
    %p117 = scmp.ne.s32.totalorder %s106, %s107
    %p118 = scmp.eq.s32.totalorder %s14, 0
    %p119 = por %p117, %p118
    %p120 = scmp.ne.s32.totalorder %s106, %s107
    %p121 = scmp.eq.s32.totalorder %s15, 1
    %p122 = por %p120, %p121
    %p124 = scmp.ne.s32.totalorder %s107, %s123
    %p125 = scmp.eq.s32.totalorder %s15, 0
    %p126 = por %p124, %p125
    %p127 = scmp.le.s32.totalorder 1, %s9
    %p128 = scmp.lt.s32.totalorder %s9, 3
    %p129 = pnand %p127, %p128
    %p130 = pneg %p129
    // Predicated region
    $region9: #{_lambda_.3} parent=5 // pred_check
      _
    $region10: #{_lambda_.3} parent=5 // pred_check_branch
      %132 = sbr.rel (%p129) target = $region12
    $region11: #{_lambda_.3} parent=5 // pred_region
      %s133 = ssub.s32 %s9, 1
      // Predicated region
      $region13: #{_lambda_.3} parent=11 // pred_check
        %p134 = pneg %p70
      $region14: #{_lambda_.3} parent=11 // pred_check_branch
        %136 = sbr.rel (%p134) target = $region16
      $region15: #{_lambda_.3} parent=11 // pred_region
        _
      $region16: #{_lambda_.3} parent=11 // pred_fallthru
        _
      // Predicated region
      $region17: #{_lambda_.3} parent=11 // pred_check
        %p137 = pneg %p91
      $region18: #{_lambda_.3} parent=11 // pred_check_branch
        %139 = sbr.rel (%p137) target = $region20
      $region19: #{_lambda_.3} parent=11 // pred_region
        _
      $region20: #{_lambda_.3} parent=11 // pred_fallthru
        _
    $region12: #{_lambda_.3} parent=5 // pred_fallthru
      _
    %p140 = scmp.lt.s32.totalorder %s9, 2
    // Predicated region
    $region21: #{_lambda_.3} parent=5 // pred_check
      %p141 = pneg %p140
    $region22: #{_lambda_.3} parent=5 // pred_check_branch
      %143 = sbr.rel (%p141) target = $region24
    $region23: #{_lambda_.3} parent=5 // pred_region
      // Predicated region
      $region25: #{_lambda_.3} parent=23 // pred_check
        %p144 = pneg %p43
      $region26: #{_lambda_.3} parent=23 // pred_check_branch
        %146 = sbr.rel (%p144) target = $region28
      $region27: #{_lambda_.3} parent=23 // pred_region
        %s147 = smul.u32 4, %s17
        %p148 = scmp.lt.s32.totalorder %s16, 1
        %s149 = scalar_select %p148, %s16, 1
        %p150 = scmp.lt.s32.totalorder %s147, 3
        %s151 = scalar_select %p150, %s147, 3
        %s152 = smul.addr %s149, 16
        %s153 = sadd.s32 %s151, %s152
        %s154 = smul.addr %s153, 4
        %s155 = scalar_lea.vmem %s0, %s154
        %s156 = smul.u32 4, %s17
      $region28: #{_lambda_.3} parent=23 // pred_fallthru
        _
    $region24: #{_lambda_.3} parent=5 // pred_fallthru
      _
    %p157 = scmp.le.s32.totalorder 1, %s9
    %p158 = scmp.lt.s32.totalorder %s9, 3
    %p159 = pnand %p157, %p158
    %p160 = pneg %p159
    // Predicated region
    $region29: #{_lambda_.3} parent=5 // pred_check
      _
    $region30: #{_lambda_.3} parent=5 // pred_check_branch
      %162 = sbr.rel (%p159) target = $region32
    $region31: #{_lambda_.3} parent=5 // pred_region
      %s163 = ssub.s32 %s9, 1
      %s164 = smul.u32 4, %s19
      %p165 = scmp.lt.s32.totalorder %s18, 1
      %s166 = scalar_select %p165, %s18, 1
      %p167 = scmp.lt.s32.totalorder %s164, 3
      %s168 = scalar_select %p167, %s164, 3
      %s169 = smul.addr %s166, 16
      %s170 = sadd.s32 %s168, %s169
      %s171 = smul.addr %s170, 4
      %s172 = scalar_lea.vmem %s0, %s171
      %p173 = pneg %p49
      %p174 = pneg %p46
      %p175 = pneg %p70
      %p176 = pneg %p67
      %p177 = pneg %p91
      %p178 = pneg %p88
      %p179 = pneg %p119
      %p180 = pneg %p116
      %s181 = smul.u32 4, %s19
      %p182 = scmp.lt.s32.totalorder %s18, 1
      %s183 = scalar_select %p182, %s18, 1
      %p184 = scmp.lt.s32.totalorder %s181, 3
      %s185 = scalar_select %p184, %s181, 3
      %s186 = smul.addr %s183, 4
      %s187 = sadd.s32 %s185, %s186
      %s188 = smul.addr %s187, 2
      %s189 = scalar_lea.vmem %s3, %s188
      %s190 = smul.u32 4, %s19
      %p191 = scmp.lt.s32.totalorder %s18, 1
      %s192 = scalar_select %p191, %s18, 1
      %p193 = scmp.lt.s32.totalorder %s190, 3
      %s194 = scalar_select %p193, %s190, 3
      %s195 = smul.addr %s192, 16
      %s196 = sadd.s32 %s194, %s195
      %s197 = smul.addr %s196, 4
      %s198 = scalar_lea.vmem %s0, %s197
      %s199 = smul.u32 4, %s19
      %s200 = smul.u32 4, %s19
      %p201 = scmp.lt.s32.totalorder %s18, 1
      %s202 = scalar_select %p201, %s18, 1
      %p203 = scmp.lt.s32.totalorder %s200, 3
      %s204 = scalar_select %p203, %s200, 3
      %s205 = smul.addr %s202, 4
      %s206 = sadd.s32 %s204, %s205
      %s207 = smul.addr %s206, 2
      %s208 = scalar_lea.vmem %s3, %s207
      %s209 = smul.u32 4, %s19
      %v211 = vld [vmem:[%s1] sm:$0x3]
      %v212 = vld [vmem:[%s198] sm:$0xff]
      %v213 = vld [vmem:[%s198 + $0x8] sm:$0xff]
      %v214 = vld [vmem:[%s198 + $0x10] sm:$0xff]
      %v215 = vld [vmem:[%s198 + $0x18] sm:$0xff]
      %v216 = vld [vmem:[%s198 + $0x20] sm:$0xff]
      %v217 = vld [vmem:[%s198 + $0x28] sm:$0xff]
      %v218 = vld [vmem:[%s198 + $0x30] sm:$0x33]
      %v219 = vld [vmem:[%s198 + $0x38] sm:$0x33]
      %v220 = vld [vmem:[%s2] sm:$0xf]
      %222 = vset.pattern.permute.xlu0 0
      %223 = vperm.xlu0 %222, %v220
      %v224 = vpop.permute.xlu0 %223
      %v234 = vunpack.c.l.b16 %v212
      %v235 = vunpack.c.h.b16 %v212
      %v236 = vunpack.c.l.b16 %v213
      %v237 = vunpack.c.h.b16 %v213
      %v238 = vunpack.c.l.b16 %v214
      %v239 = vunpack.c.h.b16 %v214
      %v240 = vunpack.c.l.b16 %v215
      %v241 = vunpack.c.h.b16 %v215
      %v242 = vunpack.c.l.b16 %v216
      %v243 = vunpack.c.h.b16 %v216
      %v244 = vunpack.c.l.b16 %v217
      %v245 = vunpack.c.h.b16 %v217
      %v246 = vunpack.c.l.b16 %v218
      %v247 = vunpack.c.h.b16 %v218
      %v248 = vunpack.c.l.b16 %v219
      %v249 = vunpack.c.h.b16 %v219
      %v250 = vpack.c.b16 %v238, %v234
      %v251 = vpack.c.b16 %v239, %v235
      %v252 = vpack.c.b16 %v240, %v236
      %v253 = vpack.c.b16 %v241, %v237
      %v254 = vpack.c.b16 %v246, %v242
      %v255 = vpack.c.b16 %v247, %v243
      %v256 = vpack.c.b16 %v248, %v244
      %v257 = vpack.c.b16 %v249, %v245
      %vm262 = vcmask 220160
      %v264 = vsel %vm262, %v211, 0
      %vm266 = vcmask 1044480
      %vm267 = vcmask 1045504
      %v268 = vsel %vm266, 4294967295, 65535
      %v269 = vsel %vm267, %v268, 0
      %v271 = vand.u32 %v254, %v269
      %v274 = vand.u32 %v255, %v269
      %v277 = vand.u32 %v256, %v269
      %v280 = vand.u32 %v257, %v269
      %282 = vmatprep.subr.bf16.mxu0 0
      %283 = vmatpush1.bf16.msra.mxu0 0
      %284 = vmatprep.subr.bf16.mxu0 0
      %285 = vmatpush1.bf16.msra.mxu0 0
      %286 = vmatprep.subr.bf16.mxu0 0
      %287 = vmatpush1.bf16.msra.mxu0 0
      %288 = vmatprep.subr.bf16.mxu0 0
      %289 = vmatpush1.bf16.msra.mxu0 0
      %290 = vmatprep.subr.bf16.mxu0 0
      %291 = vmatpush1.bf16.msra.mxu0 0
      %292 = vmatprep.subr.bf16.mxu0 0
      %293 = vmatpush1.bf16.msra.mxu0 0
      %294 = vmatprep.subr.bf16.mxu0 %v274
      %295 = vmatpush1.bf16.msra.mxu0 %v271
      %296 = vmatprep.subr.bf16.mxu0 %v251
      %297 = vmatpush1.bf16.msra.mxu0 %v250
      %298 = vmatprep.subr.bf16.mxu0 0
      %299 = vmatpush2.bf16.msra.mxu0 0
      %300 = vmatprep.subr.bf16.mxu0 0
      %301 = vmatpush2.bf16.msra.mxu0 0
      %302 = vmatprep.subr.bf16.mxu0 0
      %303 = vmatpush2.bf16.msra.mxu0 0
      %304 = vmatprep.subr.bf16.mxu0 0
      %305 = vmatpush2.bf16.msra.mxu0 0
      %306 = vmatprep.subr.bf16.mxu0 0
      %307 = vmatpush2.bf16.msra.mxu0 0
      %308 = vmatprep.subr.bf16.mxu0 0
      %309 = vmatpush2.bf16.msra.mxu0 0
      %310 = vmatprep.subr.bf16.mxu0 0
      %311 = vmatpush2.bf16.msra.mxu0 0
      %312 = vmatprep.subr.bf16.mxu0 0
      %313 = vmatpush2.bf16.msra.mxu0 0
      %314 = vmatprep.mubr.bf16.mxu0 0
      %315 = vmatmul.mubr.bf16.gmra.mxu0 %v264
      %v316 = vpop.f32.mrf.mxu0
      %v317 = vadd.f32 %v224, %v316
      %v318 = vpop.f32.mrf.mxu0
      %v319 = vadd.f32 %v224, %v318
      %v320 = vpop.f32.mrf.mxu0
      %v321 = vpop.f32.mrf.mxu0
      %322 = vdwg.mxu0
      %323 = vmatprep.subr.bf16.mxu0 0
      %324 = vmatpush1.bf16.msra.mxu0 0
      %325 = vmatprep.subr.bf16.mxu0 0
      %326 = vmatpush1.bf16.msra.mxu0 0
      %327 = vmatprep.subr.bf16.mxu0 0
      %328 = vmatpush1.bf16.msra.mxu0 0
      %329 = vmatprep.subr.bf16.mxu0 0
      %330 = vmatpush1.bf16.msra.mxu0 0
      %331 = vmatprep.subr.bf16.mxu0 0
      %332 = vmatpush1.bf16.msra.mxu0 0
      %333 = vmatprep.subr.bf16.mxu0 0
      %334 = vmatpush1.bf16.msra.mxu0 0
      %335 = vmatprep.subr.bf16.mxu0 %v280
      %336 = vmatpush1.bf16.msra.mxu0 %v277
      %337 = vmatprep.subr.bf16.mxu0 %v253
      %338 = vmatpush1.bf16.msra.mxu0 %v252
      %339 = vmatprep.subr.bf16.mxu0 0
      %340 = vmatpush2.bf16.msra.mxu0 0
      %341 = vmatprep.subr.bf16.mxu0 0
      %342 = vmatpush2.bf16.msra.mxu0 0
      %343 = vmatprep.subr.bf16.mxu0 0
      %344 = vmatpush2.bf16.msra.mxu0 0
      %345 = vmatprep.subr.bf16.mxu0 0
      %346 = vmatpush2.bf16.msra.mxu0 0
      %347 = vmatprep.subr.bf16.mxu0 0
      %348 = vmatpush2.bf16.msra.mxu0 0
      %349 = vmatprep.subr.bf16.mxu0 0
      %350 = vmatpush2.bf16.msra.mxu0 0
      %351 = vmatprep.subr.bf16.mxu0 0
      %352 = vmatpush2.bf16.msra.mxu0 0
      %353 = vmatprep.subr.bf16.mxu0 0
      %354 = vmatpush2.bf16.msra.mxu0 0
      %355 = vmatprep.mubr.bf16.mxu0 0
      %356 = vmatmul.mubr.bf16.gmra.mxu0 %v264
      %v357 = vpop.f32.mrf.mxu0
      %v358 = vadd.f32 %v224, %v357
      %v359 = vpop.f32.mrf.mxu0
      %v360 = vadd.f32 %v224, %v359
      %v361 = vpop.f32.mrf.mxu0
      %v362 = vpop.f32.mrf.mxu0
      %363 = vdwg.mxu0
      %v364 = vmax.f32 %v317, 0.0
      %v365 = vmax.f32 %v319, 0.0
      %v366 = vmax.f32 %v358, 0.0
      %v367 = vmax.f32 %v360, 0.0
      %v368 = vpack.c.bf16 %v364, %v364
      %v369 = vpack.c.bf16 %v365, %v365
      %v370 = vpack.c.bf16 %v366, %v366
      %v371 = vpack.c.bf16 %v367, %v367
      %v376 = vcombine.low %v368, %v369
      %v377 = vcombine.low %v370, %v371
      %v379 = vunpack.c.l.s4 1983009808
      %v380 = vunpack.c.0.s8 %v379
      %v381 = vlaneseq
      %v382 = vshrl.u32 %v381, 7
      %v383 = vsub.s32 %v380, %v382
      %v384 = vrot.slane %v376, %v383
      %v386 = vunpack.c.l.s4 1983009808
      %v387 = vunpack.c.0.s8 %v386
      %v388 = vlaneseq
      %v389 = vshrl.u32 %v388, 7
      %v390 = vsub.s32 %v387, %v389
      %v391 = vrot.slane %v377, %v390
      %v392 = vcombine.low %v384, %v391
      %394 = vst [vmem:[%s208] sm:$0xff] %v392
      %s395 = smul.u32 4, %s19
      %p396 = scmp.lt.s32.totalorder %s18, 1
      %s397 = scalar_select %p396, %s18, 1
      %p398 = scmp.lt.s32.totalorder %s395, 3
      %s399 = scalar_select %p398, %s395, 3
      %s400 = smul.addr %s397, 4
      %s401 = sadd.s32 %s399, %s400
      %s402 = smul.addr %s401, 2
      %s403 = scalar_lea.vmem %s3, %s402
      // Predicated region
      $region33: #{_lambda_.3} parent=31 // pred_check
        %p404 = pneg %p116
      $region34: #{_lambda_.3} parent=31 // pred_check_branch
        %406 = sbr.rel (%p404) target = $region36
      $region35: #{_lambda_.3} parent=31 // pred_region
        %s407 = smul.u32 4, %s19
      $region36: #{_lambda_.3} parent=31 // pred_fallthru
        _
    $region32: #{_lambda_.3} parent=5 // pred_fallthru
      _
    %p408 = scmp.le.s32.totalorder 2, %s9
    // Predicated region
    $region37: #{_lambda_.3} parent=5 // pred_check
      %p409 = pneg %p408
    $region38: #{_lambda_.3} parent=5 // pred_check_branch
      %411 = sbr.rel (%p409) target = $region40
    $region39: #{_lambda_.3} parent=5 // pred_region
      %s412 = ssub.s32 %s9, 2
      // Predicated region
      $region41: #{_lambda_.3} parent=39 // pred_check
        %p413 = pneg %p122
      $region42: #{_lambda_.3} parent=39 // pred_check_branch
        %415 = sbr.rel (%p413) target = $region44
      $region43: #{_lambda_.3} parent=39 // pred_region
        %s416 = smul.u32 4, %s21
        %p417 = scmp.lt.s32.totalorder %s20, 1
        %s418 = scalar_select %p417, %s20, 1
        %p419 = scmp.lt.s32.totalorder %s416, 3
        %s420 = scalar_select %p419, %s416, 3
        %s421 = smul.addr %s418, 4
        %s422 = sadd.s32 %s420, %s421
        %s423 = smul.addr %s422, 2
        %s424 = scalar_lea.vmem %s3, %s423
      $region44: #{_lambda_.3} parent=39 // pred_fallthru
        _
    $region40: #{_lambda_.3} parent=5 // pred_fallthru
      _
  $region6: #{_lambda_.3} parent=0 // loop_footer
    %s13 = sadd.s32 1, %s9
  $region7: #{_lambda_.3} parent=0 // loop_footer_branch
    %8 = sbr.rel target = $region3
  $region8: #{_lambda_.3} parent=0 // loop_exit
    _

// kernel: _lambda_.4
$region0: #{_lambda_.4}
  #allocation0 [shape = 'u32[]', space=smem, size = 0x4, offset = 0x4, fixed_abs, tag = 'smem constant byte address 0x4 - core index']
  #allocation1 [shape = 'u32[144,128]{1,0:T(1,128)}', space=vmem, size = 0x12000, scoped, tag = 'internal scratch']
  %s0 = inlined_call_operand.vmem [shape: bf16[2,108,64], index: 0, kind: input, shape index: {}]
  %s1 = inlined_call_operand.vmem [shape: bf16[8,108], index: 1, kind: input, shape index: {}]
  %s2 = inlined_call_operand.vmem [shape: f32[8,1], index: 2, kind: input, shape index: {}]
  %s3 = inlined_call_operand.vmem [shape: bf16[2,8,64], index: 3, kind: output, shape index: {}]
  %s4 = sld [smem:[#allocation0]]
  $region45: #{_lambda_.4} parent=0
    _
  %s6 = ssub.s32 1, %s4
  %s7 = scalar_select 0, %s6, %s4
  loop: start=0, step=1, limit=4
  $region2: #{_lambda_.4} parent=0 // loop_pre_header
    _
  $region3: #{_lambda_.4} parent=0 // loop_header
    %s9 = sphi 0, %s13
    %p10 = scmp.ge.s32.totalorder %s9, 4
    %s16 = sphi 0, %s28
    %s17 = sphi 0, %s24
    %s18 = sphi 0, %s16
    %s19 = sphi 0, %s17
    %s20 = sphi 0, %s18
    %s21 = sphi 0, %s19
    %s33 = sphi 0, %s35
    %s36 = sphi 0, %s33
    %s37 = sphi 0, %s36
    %s53 = sphi 0, %s37
    %s57 = sphi 0, %s57
    %s59 = sphi 0, %s57
    %s60 = sphi 0, %s59
    %s74 = sphi 0, %s60
    %s78 = sphi 0, %s78
    %s80 = sphi 0, %s78
    %s81 = sphi 0, %s80
    %s95 = sphi 0, %s81
    %s103 = sphi 0, %s105
    %s106 = sphi 0, %s103
    %s107 = sphi 0, %s106
    %s123 = sphi 0, %s107
  $region4: #{_lambda_.4} parent=0 // loop_header_branch
    %12 = sbr.rel (%p10) target = $region8
  $region5: #{_lambda_.4} parent=0 // loop_body
    %s14 = ssub.s32 %s9, 1
    %s15 = ssub.s32 %s9, 2
    %s22 = sadd.s32 1, %s17
    %p23 = scmp.ge.s32.totalorder %s22, 1
    %s24 = scalar_select %p23, 0, %s22
    %s25 = sadd.s32 1, %s16
    %s26 = scalar_select %p23, %s25, %s16
    %p27 = scmp.ge.s32.totalorder %s26, 2
    %s28 = scalar_select %p27, 0, %s26
    %s29 = ssub.s32 %s16, %s28
    %s30 = ssub.s32 %s17, %s24
    %s31 = sor.u32 %s29, %s30
    %p32 = scmp.eq.s32.totalorder %s31, 0
    %s34 = sadd.s32 %s33, 1
    %s35 = scalar_select %p32, %s33, %s34
    %p38 = pneg %p32
    %p39 = scmp.eq.s32.totalorder %s9, 1
    %p40 = por %p38, %p39
    %p41 = scmp.ne.s32.totalorder %s33, %s36
    %p42 = scmp.eq.s32.totalorder %s9, 0
    %p43 = por %p41, %p42
    %p44 = scmp.ne.s32.totalorder %s33, %s36
    %p45 = scmp.eq.s32.totalorder %s14, 1
    %p46 = por %p44, %p45
    %p47 = scmp.ne.s32.totalorder %s36, %s37
    %p48 = scmp.eq.s32.totalorder %s14, 0
    %p49 = por %p47, %p48
    %p50 = scmp.ne.s32.totalorder %s36, %s37
    %p51 = scmp.eq.s32.totalorder %s15, 1
    %p52 = por %p50, %p51
    %p54 = scmp.ne.s32.totalorder %s37, %s53
    %p55 = scmp.eq.s32.totalorder %s15, 0
    %p56 = por %p54, %p55
    %s58 = sadd.s32 %s57, 1
    %p61 = scmp.eq.s32.totalorder %s9, 1
    %p62 = scmp.ne.s32.totalorder %s57, %s59
    %p63 = scmp.eq.s32.totalorder %s9, 0
    %p64 = por %p62, %p63
    %p65 = scmp.ne.s32.totalorder %s57, %s59
    %p66 = scmp.eq.s32.totalorder %s14, 1
    %p67 = por %p65, %p66
    %p68 = scmp.ne.s32.totalorder %s59, %s60
    %p69 = scmp.eq.s32.totalorder %s14, 0
    %p70 = por %p68, %p69
    %p71 = scmp.ne.s32.totalorder %s59, %s60
    %p72 = scmp.eq.s32.totalorder %s15, 1
    %p73 = por %p71, %p72
    %p75 = scmp.ne.s32.totalorder %s60, %s74
    %p76 = scmp.eq.s32.totalorder %s15, 0
    %p77 = por %p75, %p76
    %s79 = sadd.s32 %s78, 1
    %p82 = scmp.eq.s32.totalorder %s9, 1
    %p83 = scmp.ne.s32.totalorder %s78, %s80
    %p84 = scmp.eq.s32.totalorder %s9, 0
    %p85 = por %p83, %p84
    %p86 = scmp.ne.s32.totalorder %s78, %s80
    %p87 = scmp.eq.s32.totalorder %s14, 1
    %p88 = por %p86, %p87
    %p89 = scmp.ne.s32.totalorder %s80, %s81
    %p90 = scmp.eq.s32.totalorder %s14, 0
    %p91 = por %p89, %p90
    %p92 = scmp.ne.s32.totalorder %s80, %s81
    %p93 = scmp.eq.s32.totalorder %s15, 1
    %p94 = por %p92, %p93
    %p96 = scmp.ne.s32.totalorder %s81, %s95
    %p97 = scmp.eq.s32.totalorder %s15, 0
    %p98 = por %p96, %p97
    %s99 = ssub.s32 %s16, %s28
    %s100 = ssub.s32 %s17, %s24
    %s101 = sor.u32 %s99, %s100
    %p102 = scmp.eq.s32.totalorder %s101, 0
    %s104 = sadd.s32 %s103, 1
    %s105 = scalar_select %p102, %s103, %s104
    %p108 = pneg %p102
    %p109 = scmp.eq.s32.totalorder %s9, 1
    %p110 = por %p108, %p109
    %p111 = scmp.ne.s32.totalorder %s103, %s106
    %p112 = scmp.eq.s32.totalorder %s9, 0
    %p113 = por %p111, %p112
    %p114 = scmp.ne.s32.totalorder %s103, %s106
    %p115 = scmp.eq.s32.totalorder %s14, 1
    %p116 = por %p114, %p115
    %p117 = scmp.ne.s32.totalorder %s106, %s107
    %p118 = scmp.eq.s32.totalorder %s14, 0
    %p119 = por %p117, %p118
    %p120 = scmp.ne.s32.totalorder %s106, %s107
    %p121 = scmp.eq.s32.totalorder %s15, 1
    %p122 = por %p120, %p121
    %p124 = scmp.ne.s32.totalorder %s107, %s123
    %p125 = scmp.eq.s32.totalorder %s15, 0
    %p126 = por %p124, %p125
    %p127 = scmp.le.s32.totalorder 1, %s9
    %p128 = scmp.lt.s32.totalorder %s9, 3
    %p129 = pnand %p127, %p128
    %p130 = pneg %p129
    // Predicated region
    $region9: #{_lambda_.4} parent=5 // pred_check
      _
    $region10: #{_lambda_.4} parent=5 // pred_check_branch
      %132 = sbr.rel (%p129) target = $region12
    $region11: #{_lambda_.4} parent=5 // pred_region
      %s133 = ssub.s32 %s9, 1
      // Predicated region
      $region13: #{_lambda_.4} parent=11 // pred_check
        %p134 = pneg %p70
      $region14: #{_lambda_.4} parent=11 // pred_check_branch
        %136 = sbr.rel (%p134) target = $region16
      $region15: #{_lambda_.4} parent=11 // pred_region
        _
      $region16: #{_lambda_.4} parent=11 // pred_fallthru
        _
      // Predicated region
      $region17: #{_lambda_.4} parent=11 // pred_check
        %p137 = pneg %p91
      $region18: #{_lambda_.4} parent=11 // pred_check_branch
        %139 = sbr.rel (%p137) target = $region20
      $region19: #{_lambda_.4} parent=11 // pred_region
        _
      $region20: #{_lambda_.4} parent=11 // pred_fallthru
        _
    $region12: #{_lambda_.4} parent=5 // pred_fallthru
      _
    %p140 = scmp.lt.s32.totalorder %s9, 2
    // Predicated region
    $region21: #{_lambda_.4} parent=5 // pred_check
      %p141 = pneg %p140
    $region22: #{_lambda_.4} parent=5 // pred_check_branch
      %143 = sbr.rel (%p141) target = $region24
    $region23: #{_lambda_.4} parent=5 // pred_region
      // Predicated region
      $region25: #{_lambda_.4} parent=23 // pred_check
        %p144 = pneg %p43
      $region26: #{_lambda_.4} parent=23 // pred_check_branch
        %146 = sbr.rel (%p144) target = $region28
      $region27: #{_lambda_.4} parent=23 // pred_region
        %p147 = scmp.lt.s32.totalorder %s16, 1
        %s148 = scalar_select %p147, %s16, 1
        %p149 = scmp.lt.s32.totalorder %s17, 0
        %s150 = scalar_select %p149, %s17, 0
        %s151 = smul.addr %s148, 14
        %s152 = sadd.s32 %s150, %s151
        %s153 = smul.addr %s152, 4
        %s154 = scalar_lea.vmem %s0, %s153
      $region28: #{_lambda_.4} parent=23 // pred_fallthru
        _
    $region24: #{_lambda_.4} parent=5 // pred_fallthru
      _
    %p155 = scmp.le.s32.totalorder 1, %s9
    %p156 = scmp.lt.s32.totalorder %s9, 3
    %p157 = pnand %p155, %p156
    %p158 = pneg %p157
    // Predicated region
    $region29: #{_lambda_.4} parent=5 // pred_check
      _
    $region30: #{_lambda_.4} parent=5 // pred_check_branch
      %160 = sbr.rel (%p157) target = $region32
    $region31: #{_lambda_.4} parent=5 // pred_region
      %s161 = ssub.s32 %s9, 1
      %p162 = scmp.lt.s32.totalorder %s18, 1
      %s163 = scalar_select %p162, %s18, 1
      %p164 = scmp.lt.s32.totalorder %s19, 0
      %s165 = scalar_select %p164, %s19, 0
      %s166 = smul.addr %s163, 14
      %s167 = sadd.s32 %s165, %s166
      %s168 = smul.addr %s167, 4
      %s169 = scalar_lea.vmem %s0, %s168
      %p170 = pneg %p49
      %p171 = pneg %p46
      %p172 = pneg %p70
      %p173 = pneg %p67
      %p174 = pneg %p91
      %p175 = pneg %p88
      %p176 = pneg %p119
      %p177 = pneg %p116
      %p178 = scmp.lt.s32.totalorder %s18, 1
      %s179 = scalar_select %p178, %s18, 1
      %p180 = scmp.lt.s32.totalorder %s19, 0
      %s181 = scalar_select %p180, %s19, 0
      %s182 = sadd.s32 %s181, %s179
      %s183 = smul.addr %s182, 4
      %s184 = scalar_lea.vmem %s3, %s183
      %p185 = scmp.lt.s32.totalorder %s18, 1
      %s186 = scalar_select %p185, %s18, 1
      %p187 = scmp.lt.s32.totalorder %s19, 0
      %s188 = scalar_select %p187, %s19, 0
      %s189 = smul.addr %s186, 14
      %s190 = sadd.s32 %s188, %s189
      %s191 = smul.addr %s190, 4
      %s192 = scalar_lea.vmem %s0, %s191
      %p193 = scmp.lt.s32.totalorder %s18, 1
      %s194 = scalar_select %p193, %s18, 1
      %p195 = scmp.lt.s32.totalorder %s19, 0
      %s196 = scalar_select %p195, %s19, 0
      %s197 = sadd.s32 %s196, %s194
      %s198 = smul.addr %s197, 4
      %s199 = scalar_lea.vmem %s3, %s198
      %v201 = vld [vmem:[%s1] sm:$0xf]
      %v202 = vld [vmem:[%s192] sm:$0xf]
      %v203 = vld [vmem:[%s192 + $0x4] sm:$0xf]
      %v204 = vld [vmem:[%s192 + $0x8] sm:$0xf]
      %v205 = vld [vmem:[%s192 + $0xc] sm:$0xf]
      %v206 = vld [vmem:[%s192 + $0x10] sm:$0xf]
      %v207 = vld [vmem:[%s192 + $0x14] sm:$0xf]
      %v208 = vld [vmem:[%s192 + $0x18] sm:$0xf]
      %v209 = vld [vmem:[%s192 + $0x1c] sm:$0xf]
      %v210 = vld [vmem:[%s192 + $0x20] sm:$0xf]
      %v211 = vld [vmem:[%s192 + $0x24] sm:$0xf]
      %v212 = vld [vmem:[%s192 + $0x28] sm:$0xf]
      %v213 = vld [vmem:[%s192 + $0x2c] sm:$0xf]
      %v214 = vld [vmem:[%s192 + $0x30] sm:$0xf]
      %v215 = vld [vmem:[%s192 + $0x34] sm:$0x3]
      %v216 = vld [vmem:[%s2] sm:$0xff]
      %218 = vset.pattern.permute.xlu0 0
      %219 = vperm.xlu0 %218, %v216
      %v220 = vpop.permute.xlu0 %219
      %v236 = vunpack.c.l.b16 %v202
      %v237 = vunpack.c.l.b16 %v203
      %v238 = vunpack.c.l.b16 %v204
      %v239 = vunpack.c.l.b16 %v205
      %v240 = vunpack.c.l.b16 %v206
      %v241 = vunpack.c.l.b16 %v207
      %v242 = vunpack.c.l.b16 %v208
      %v243 = vunpack.c.l.b16 %v209
      %v244 = vunpack.c.l.b16 %v210
      %v245 = vunpack.c.l.b16 %v211
      %v246 = vunpack.c.l.b16 %v212
      %v247 = vunpack.c.l.b16 %v213
      %v248 = vunpack.c.l.b16 %v214
      %v249 = vunpack.c.l.b16 %v215
      %v250 = vpack.c.b16 %v237, %v236
      %v251 = vpack.c.b16 %v239, %v238
      %v252 = vpack.c.b16 %v241, %v240
      %v253 = vpack.c.b16 %v243, %v242
      %v254 = vpack.c.b16 %v245, %v244
      %v255 = vpack.c.b16 %v247, %v246
      %v256 = vpack.c.b16 %v249, %v248
      %vm263 = vcmask 883712
      %v265 = vsel %vm263, %v201, 0
      %vm267 = vcmask 1045504
      %v269 = vsel %vm267, %v256, 0
      %271 = vmatprep.subr.bf16.mxu0 0
      %272 = vmatpush1.bf16.msra.mxu0 0
      %273 = vmatprep.subr.bf16.mxu0 0
      %274 = vmatpush1.bf16.msra.mxu0 %v269
      %275 = vmatprep.subr.bf16.mxu0 0
      %276 = vmatpush1.bf16.msra.mxu0 %v255
      %277 = vmatprep.subr.bf16.mxu0 0
      %278 = vmatpush1.bf16.msra.mxu0 %v254
      %279 = vmatprep.subr.bf16.mxu0 0
      %280 = vmatpush1.bf16.msra.mxu0 %v253
      %281 = vmatprep.subr.bf16.mxu0 0
      %282 = vmatpush1.bf16.msra.mxu0 %v252
      %283 = vmatprep.subr.bf16.mxu0 0
      %284 = vmatpush1.bf16.msra.mxu0 %v251
      %285 = vmatprep.subr.bf16.mxu0 0
      %286 = vmatpush1.bf16.msra.mxu0 %v250
      %287 = vmatprep.subr.bf16.mxu0 0
      %288 = vmatpush2.bf16.msra.mxu0 0
      %289 = vmatprep.subr.bf16.mxu0 0
      %290 = vmatpush2.bf16.msra.mxu0 0
      %291 = vmatprep.subr.bf16.mxu0 0
      %292 = vmatpush2.bf16.msra.mxu0 0
      %293 = vmatprep.subr.bf16.mxu0 0
      %294 = vmatpush2.bf16.msra.mxu0 0
      %295 = vmatprep.subr.bf16.mxu0 0
      %296 = vmatpush2.bf16.msra.mxu0 0
      %297 = vmatprep.subr.bf16.mxu0 0
      %298 = vmatpush2.bf16.msra.mxu0 0
      %299 = vmatprep.subr.bf16.mxu0 0
      %300 = vmatpush2.bf16.msra.mxu0 0
      %301 = vmatprep.subr.bf16.mxu0 0
      %302 = vmatpush2.bf16.msra.mxu0 0
      %303 = vmatprep.mubr.bf16.mxu0 0
      %304 = vmatmul.mubr.bf16.gmra.mxu0 %v265
      %v305 = vpop.f32.mrf.mxu0
      %v306 = vadd.f32 %v220, %v305
      %v307 = vpop.f32.mrf.mxu0
      %v308 = vpop.f32.mrf.mxu0
      %v309 = vpop.f32.mrf.mxu0
      %310 = vdwg.mxu0
      %v311 = vmax.f32 %v306, 0.0
      %v312 = vpack.c.bf16 %v311, %v311
      %vm313 = vcmask 519168
      %314 = vst.msk [vmem:[%s199] sm:$0xf] %vm313, %v312
      %p315 = scmp.lt.s32.totalorder %s18, 1
      %s316 = scalar_select %p315, %s18, 1
      %p317 = scmp.lt.s32.totalorder %s19, 0
      %s318 = scalar_select %p317, %s19, 0
      %s319 = sadd.s32 %s318, %s316
      %s320 = smul.addr %s319, 4
      %s321 = scalar_lea.vmem %s3, %s320
      // Predicated region
      $region33: #{_lambda_.4} parent=31 // pred_check
        %p322 = pneg %p116
      $region34: #{_lambda_.4} parent=31 // pred_check_branch
        %324 = sbr.rel (%p322) target = $region36
      $region35: #{_lambda_.4} parent=31 // pred_region
        _
      $region36: #{_lambda_.4} parent=31 // pred_fallthru
        _
    $region32: #{_lambda_.4} parent=5 // pred_fallthru
      _
    %p325 = scmp.le.s32.totalorder 2, %s9
    // Predicated region
    $region37: #{_lambda_.4} parent=5 // pred_check
      %p326 = pneg %p325
    $region38: #{_lambda_.4} parent=5 // pred_check_branch
      %328 = sbr.rel (%p326) target = $region40
    $region39: #{_lambda_.4} parent=5 // pred_region
      %s329 = ssub.s32 %s9, 2
      // Predicated region
      $region41: #{_lambda_.4} parent=39 // pred_check
        %p330 = pneg %p122
      $region42: #{_lambda_.4} parent=39 // pred_check_branch
        %332 = sbr.rel (%p330) target = $region44
      $region43: #{_lambda_.4} parent=39 // pred_region
        %p333 = scmp.lt.s32.totalorder %s20, 1
        %s334 = scalar_select %p333, %s20, 1
        %p335 = scmp.lt.s32.totalorder %s21, 0
        %s336 = scalar_select %p335, %s21, 0
        %s337 = sadd.s32 %s336, %s334
        %s338 = smul.addr %s337, 4
        %s339 = scalar_lea.vmem %s3, %s338
      $region44: #{_lambda_.4} parent=39 // pred_fallthru
        _
    $region40: #{_lambda_.4} parent=5 // pred_fallthru
      _
  $region6: #{_lambda_.4} parent=0 // loop_footer
    %s13 = sadd.s32 1, %s9
  $region7: #{_lambda_.4} parent=0 // loop_footer_branch
    %8 = sbr.rel target = $region3
  $region8: #{_lambda_.4} parent=0 // loop_exit
    _

// kernel: _lambda_.5
$region0: #{_lambda_.5}
  #allocation0 [shape = 'u32[]', space=smem, size = 0x4, offset = 0x4, fixed_abs, tag = 'smem constant byte address 0x4 - core index']
  #allocation1 [shape = 'u32[144,128]{1,0:T(1,128)}', space=vmem, size = 0x12000, scoped, tag = 'internal scratch']
  %s0 = inlined_call_operand.vmem [shape: bf16[2,512], index: 0, kind: input, shape index: {}]
  %s1 = inlined_call_operand.vmem [shape: bf16[512,32], index: 1, kind: input, shape index: {}]
  %s2 = inlined_call_operand.vmem [shape: f32[1,32], index: 2, kind: input, shape index: {}]
  %s3 = inlined_call_operand.vmem [shape: bf16[32,16], index: 3, kind: input, shape index: {}]
  %s4 = inlined_call_operand.vmem [shape: f32[1,16], index: 4, kind: input, shape index: {}]
  %s5 = inlined_call_operand.vmem [shape: f32[2,8], index: 5, kind: input, shape index: {}]
  %s6 = inlined_call_operand.vmem [shape: f32[2,16], index: 6, kind: output, shape index: {0}]
  %s7 = inlined_call_operand.hbm [shape: f32[2,8], index: 7, kind: output, shape index: {1}]
  %8 = xla_tuple %s6, %s7
  %s9 = sld [smem:[#allocation0]]
  $region42: #{_lambda_.5} parent=0
    _
  %s11 = ssub.s32 1, %s9
  %s12 = scalar_select 0, %s11, %s9
  $region1: #{_lambda_.5} parent=0
    #allocation2 [shape = 'u8[1024]{0}', space=vmem, size = 0x400, scoped, tag = 'output window, operand 1, single buffered']
    #allocation3 [shape = 's32[1]{0}', space=sflag, size = 0x4, scoped, tag = 'scoped memory for _lambda_.5']
    %13 = vsyncpa [#allocation3], 0
    // Predicated region
    $region2: #{_lambda_.5} parent=1 // pred_check
      _
    $region3: #{_lambda_.5} parent=1 // pred_check_branch
      %15 = sbr.rel (0) target = $region5
    $region4: #{_lambda_.5} parent=1 // pred_region
      _
    $region5: #{_lambda_.5} parent=1 // pred_fallthru
      _
    // Predicated region
    $region6: #{_lambda_.5} parent=1 // pred_check
      _
    $region7: #{_lambda_.5} parent=1 // pred_check_branch
      %17 = sbr.rel (0) target = $region9
    $region8: #{_lambda_.5} parent=1 // pred_region
      _
    $region9: #{_lambda_.5} parent=1 // pred_fallthru
      _
    // Predicated region
    $region10: #{_lambda_.5} parent=1 // pred_check
      _
    $region11: #{_lambda_.5} parent=1 // pred_check_branch
      %19 = sbr.rel (0) target = $region13
    $region12: #{_lambda_.5} parent=1 // pred_region
      _
    $region13: #{_lambda_.5} parent=1 // pred_fallthru
      _
    // Predicated region
    $region14: #{_lambda_.5} parent=1 // pred_check
      _
    $region15: #{_lambda_.5} parent=1 // pred_check_branch
      %21 = sbr.rel (0) target = $region17
    $region16: #{_lambda_.5} parent=1 // pred_region
      _
    $region17: #{_lambda_.5} parent=1 // pred_fallthru
      _
    // Predicated region
    $region18: #{_lambda_.5} parent=1 // pred_check
      _
    $region19: #{_lambda_.5} parent=1 // pred_check_branch
      %23 = sbr.rel (0) target = $region21
    $region20: #{_lambda_.5} parent=1 // pred_region
      _
    $region21: #{_lambda_.5} parent=1 // pred_fallthru
      _
    // Predicated region
    $region22: #{_lambda_.5} parent=1 // pred_check
      _
    $region23: #{_lambda_.5} parent=1 // pred_check_branch
      %25 = sbr.rel (0) target = $region25
    $region24: #{_lambda_.5} parent=1 // pred_region
      _
    $region25: #{_lambda_.5} parent=1 // pred_fallthru
      _
    %v27 = vld [vmem:[%s0] sm:$0xf]
    %v28 = vld [vmem:[%s1] sm:$0xf]
    %v29 = vld [vmem:[%s1 + $0x4] sm:$0xf]
    %v30 = vld [vmem:[%s1 + $0x8] sm:$0xf]
    %v31 = vld [vmem:[%s1 + $0xc] sm:$0xf]
    %v32 = vld [vmem:[%s1 + $0x10] sm:$0xf]
    %v33 = vld [vmem:[%s1 + $0x14] sm:$0xf]
    %v34 = vld [vmem:[%s1 + $0x18] sm:$0xf]
    %v35 = vld [vmem:[%s1 + $0x1c] sm:$0xf]
    %v36 = vld [vmem:[%s1 + $0x20] sm:$0xf]
    %v37 = vld [vmem:[%s1 + $0x24] sm:$0xf]
    %v38 = vld [vmem:[%s1 + $0x28] sm:$0xf]
    %v39 = vld [vmem:[%s1 + $0x2c] sm:$0xf]
    %v40 = vld [vmem:[%s1 + $0x30] sm:$0xf]
    %v41 = vld [vmem:[%s1 + $0x34] sm:$0xf]
    %v42 = vld [vmem:[%s1 + $0x38] sm:$0xf]
    %v43 = vld [vmem:[%s1 + $0x3c] sm:$0xf]
    %v44 = vld [vmem:[%s1 + $0x40] sm:$0xf]
    %v45 = vld [vmem:[%s1 + $0x44] sm:$0xf]
    %v46 = vld [vmem:[%s1 + $0x48] sm:$0xf]
    %v47 = vld [vmem:[%s1 + $0x4c] sm:$0xf]
    %v48 = vld [vmem:[%s1 + $0x50] sm:$0xf]
    %v49 = vld [vmem:[%s1 + $0x54] sm:$0xf]
    %v50 = vld [vmem:[%s1 + $0x58] sm:$0xf]
    %v51 = vld [vmem:[%s1 + $0x5c] sm:$0xf]
    %v52 = vld [vmem:[%s1 + $0x60] sm:$0xf]
    %v53 = vld [vmem:[%s1 + $0x64] sm:$0xf]
    %v54 = vld [vmem:[%s1 + $0x68] sm:$0xf]
    %v55 = vld [vmem:[%s1 + $0x6c] sm:$0xf]
    %v56 = vld [vmem:[%s1 + $0x70] sm:$0xf]
    %v57 = vld [vmem:[%s1 + $0x74] sm:$0xf]
    %v58 = vld [vmem:[%s1 + $0x78] sm:$0xf]
    %v59 = vld [vmem:[%s1 + $0x7c] sm:$0xf]
    %v60 = vld [vmem:[%s1 + $0x80] sm:$0xf]
    %v61 = vld [vmem:[%s1 + $0x84] sm:$0xf]
    %v62 = vld [vmem:[%s1 + $0x88] sm:$0xf]
    %v63 = vld [vmem:[%s1 + $0x8c] sm:$0xf]
    %v64 = vld [vmem:[%s1 + $0x90] sm:$0xf]
    %v65 = vld [vmem:[%s1 + $0x94] sm:$0xf]
    %v66 = vld [vmem:[%s1 + $0x98] sm:$0xf]
    %v67 = vld [vmem:[%s1 + $0x9c] sm:$0xf]
    %v68 = vld [vmem:[%s1 + $0xa0] sm:$0xf]
    %v69 = vld [vmem:[%s1 + $0xa4] sm:$0xf]
    %v70 = vld [vmem:[%s1 + $0xa8] sm:$0xf]
    %v71 = vld [vmem:[%s1 + $0xac] sm:$0xf]
    %v72 = vld [vmem:[%s1 + $0xb0] sm:$0xf]
    %v73 = vld [vmem:[%s1 + $0xb4] sm:$0xf]
    %v74 = vld [vmem:[%s1 + $0xb8] sm:$0xf]
    %v75 = vld [vmem:[%s1 + $0xbc] sm:$0xf]
    %v76 = vld [vmem:[%s1 + $0xc0] sm:$0xf]
    %v77 = vld [vmem:[%s1 + $0xc4] sm:$0xf]
    %v78 = vld [vmem:[%s1 + $0xc8] sm:$0xf]
    %v79 = vld [vmem:[%s1 + $0xcc] sm:$0xf]
    %v80 = vld [vmem:[%s1 + $0xd0] sm:$0xf]
    %v81 = vld [vmem:[%s1 + $0xd4] sm:$0xf]
    %v82 = vld [vmem:[%s1 + $0xd8] sm:$0xf]
    %v83 = vld [vmem:[%s1 + $0xdc] sm:$0xf]
    %v84 = vld [vmem:[%s1 + $0xe0] sm:$0xf]
    %v85 = vld [vmem:[%s1 + $0xe4] sm:$0xf]
    %v86 = vld [vmem:[%s1 + $0xe8] sm:$0xf]
    %v87 = vld [vmem:[%s1 + $0xec] sm:$0xf]
    %v88 = vld [vmem:[%s1 + $0xf0] sm:$0xf]
    %v89 = vld [vmem:[%s1 + $0xf4] sm:$0xf]
    %v90 = vld [vmem:[%s1 + $0xf8] sm:$0xf]
    %v91 = vld [vmem:[%s1 + $0xfc] sm:$0xf]
    %v92 = vld [vmem:[%s2] sm:$0x1]
    %v94 = vlaneseq
    %v95 = vshrl.u32 %v94, 7
    %v96 = vsub.s32 0, %v95
    %v97 = vrot.slane %v92, %v96
    %v101 = vunpack.c.l.s4 1966171168
    %v102 = vunpack.c.0.s8 %v101
    %v103 = vlaneseq
    %v104 = vshrl.u32 %v103, 7
    %v105 = vsub.s32 %v102, %v104
    %v106 = vrot.slane %v27, %v105
    %v107 = vcombine.high %v106, %v106
    %v109 = vunpack.c.l.s4 1966171168
    %v110 = vunpack.c.0.s8 %v109
    %v111 = vlaneseq
    %v112 = vshrl.u32 %v111, 7
    %v113 = vsub.s32 %v110, %v112
    %v114 = vrot.slane %v106, %v113
    %v116 = vunpack.c.l.s4 1966171168
    %v117 = vunpack.c.0.s8 %v116
    %v118 = vlaneseq
    %v119 = vshrl.u32 %v118, 7
    %v120 = vsub.s32 %v117, %v119
    %v121 = vrot.slane %v107, %v120
    %v122 = vcombine.high %v114, %v114
    %v123 = vcombine.high %v121, %v121
    %v192 = vunpack.c.l.b16 %v28
    %v193 = vunpack.c.l.b16 %v29
    %v194 = vunpack.c.l.b16 %v30
    %v195 = vunpack.c.l.b16 %v31
    %v196 = vunpack.c.l.b16 %v32
    %v197 = vunpack.c.l.b16 %v33
    %v198 = vunpack.c.l.b16 %v34
    %v199 = vunpack.c.l.b16 %v35
    %v200 = vunpack.c.l.b16 %v36
    %v201 = vunpack.c.l.b16 %v37
    %v202 = vunpack.c.l.b16 %v38
    %v203 = vunpack.c.l.b16 %v39
    %v204 = vunpack.c.l.b16 %v40
    %v205 = vunpack.c.l.b16 %v41
    %v206 = vunpack.c.l.b16 %v42
    %v207 = vunpack.c.l.b16 %v43
    %v208 = vunpack.c.l.b16 %v44
    %v209 = vunpack.c.l.b16 %v45
    %v210 = vunpack.c.l.b16 %v46
    %v211 = vunpack.c.l.b16 %v47
    %v212 = vunpack.c.l.b16 %v48
    %v213 = vunpack.c.l.b16 %v49
    %v214 = vunpack.c.l.b16 %v50
    %v215 = vunpack.c.l.b16 %v51
    %v216 = vunpack.c.l.b16 %v52
    %v217 = vunpack.c.l.b16 %v53
    %v218 = vunpack.c.l.b16 %v54
    %v219 = vunpack.c.l.b16 %v55
    %v220 = vunpack.c.l.b16 %v56
    %v221 = vunpack.c.l.b16 %v57
    %v222 = vunpack.c.l.b16 %v58
    %v223 = vunpack.c.l.b16 %v59
    %v224 = vunpack.c.l.b16 %v60
    %v225 = vunpack.c.l.b16 %v61
    %v226 = vunpack.c.l.b16 %v62
    %v227 = vunpack.c.l.b16 %v63
    %v228 = vunpack.c.l.b16 %v64
    %v229 = vunpack.c.l.b16 %v65
    %v230 = vunpack.c.l.b16 %v66
    %v231 = vunpack.c.l.b16 %v67
    %v232 = vunpack.c.l.b16 %v68
    %v233 = vunpack.c.l.b16 %v69
    %v234 = vunpack.c.l.b16 %v70
    %v235 = vunpack.c.l.b16 %v71
    %v236 = vunpack.c.l.b16 %v72
    %v237 = vunpack.c.l.b16 %v73
    %v238 = vunpack.c.l.b16 %v74
    %v239 = vunpack.c.l.b16 %v75
    %v240 = vunpack.c.l.b16 %v76
    %v241 = vunpack.c.l.b16 %v77
    %v242 = vunpack.c.l.b16 %v78
    %v243 = vunpack.c.l.b16 %v79
    %v244 = vunpack.c.l.b16 %v80
    %v245 = vunpack.c.l.b16 %v81
    %v246 = vunpack.c.l.b16 %v82
    %v247 = vunpack.c.l.b16 %v83
    %v248 = vunpack.c.l.b16 %v84
    %v249 = vunpack.c.l.b16 %v85
    %v250 = vunpack.c.l.b16 %v86
    %v251 = vunpack.c.l.b16 %v87
    %v252 = vunpack.c.l.b16 %v88
    %v253 = vunpack.c.l.b16 %v89
    %v254 = vunpack.c.l.b16 %v90
    %v255 = vunpack.c.l.b16 %v91
    %v256 = vpack.c.b16 %v193, %v192
    %v257 = vpack.c.b16 %v195, %v194
    %v258 = vpack.c.b16 %v197, %v196
    %v259 = vpack.c.b16 %v199, %v198
    %v260 = vpack.c.b16 %v201, %v200
    %v261 = vpack.c.b16 %v203, %v202
    %v262 = vpack.c.b16 %v205, %v204
    %v263 = vpack.c.b16 %v207, %v206
    %v264 = vpack.c.b16 %v209, %v208
    %v265 = vpack.c.b16 %v211, %v210
    %v266 = vpack.c.b16 %v213, %v212
    %v267 = vpack.c.b16 %v215, %v214
    %v268 = vpack.c.b16 %v217, %v216
    %v269 = vpack.c.b16 %v219, %v218
    %v270 = vpack.c.b16 %v221, %v220
    %v271 = vpack.c.b16 %v223, %v222
    %v272 = vpack.c.b16 %v225, %v224
    %v273 = vpack.c.b16 %v227, %v226
    %v274 = vpack.c.b16 %v229, %v228
    %v275 = vpack.c.b16 %v231, %v230
    %v276 = vpack.c.b16 %v233, %v232
    %v277 = vpack.c.b16 %v235, %v234
    %v278 = vpack.c.b16 %v237, %v236
    %v279 = vpack.c.b16 %v239, %v238
    %v280 = vpack.c.b16 %v241, %v240
    %v281 = vpack.c.b16 %v243, %v242
    %v282 = vpack.c.b16 %v245, %v244
    %v283 = vpack.c.b16 %v247, %v246
    %v284 = vpack.c.b16 %v249, %v248
    %v285 = vpack.c.b16 %v251, %v250
    %v286 = vpack.c.b16 %v253, %v252
    %v287 = vpack.c.b16 %v255, %v254
    %320 = vmatprep.subr.bf16.mxu0 0
    %321 = vmatpush1.bf16.msra.mxu0 %v263
    %322 = vmatprep.subr.bf16.mxu0 0
    %323 = vmatpush1.bf16.msra.mxu0 %v262
    %324 = vmatprep.subr.bf16.mxu0 0
    %325 = vmatpush1.bf16.msra.mxu0 %v261
    %326 = vmatprep.subr.bf16.mxu0 0
    %327 = vmatpush1.bf16.msra.mxu0 %v260
    %328 = vmatprep.subr.bf16.mxu0 0
    %329 = vmatpush1.bf16.msra.mxu0 %v259
    %330 = vmatprep.subr.bf16.mxu0 0
    %331 = vmatpush1.bf16.msra.mxu0 %v258
    %332 = vmatprep.subr.bf16.mxu0 0
    %333 = vmatpush1.bf16.msra.mxu0 %v257
    %334 = vmatprep.subr.bf16.mxu0 0
    %335 = vmatpush1.bf16.msra.mxu0 %v256
    %336 = vmatprep.subr.bf16.mxu0 0
    %337 = vmatpush2.bf16.msra.mxu0 %v271
    %338 = vmatprep.subr.bf16.mxu0 0
    %339 = vmatpush2.bf16.msra.mxu0 %v270
    %340 = vmatprep.subr.bf16.mxu0 0
    %341 = vmatpush2.bf16.msra.mxu0 %v269
    %342 = vmatprep.subr.bf16.mxu0 0
    %343 = vmatpush2.bf16.msra.mxu0 %v268
    %344 = vmatprep.subr.bf16.mxu0 0
    %345 = vmatpush2.bf16.msra.mxu0 %v267
    %346 = vmatprep.subr.bf16.mxu0 0
    %347 = vmatpush2.bf16.msra.mxu0 %v266
    %348 = vmatprep.subr.bf16.mxu0 0
    %349 = vmatpush2.bf16.msra.mxu0 %v265
    %350 = vmatprep.subr.bf16.mxu0 0
    %351 = vmatpush2.bf16.msra.mxu0 %v264
    %352 = vmatprep.mubr.bf16.mxu0 %v121
    %353 = vmatmul.mubr.bf16.gmra.mxu0 %v114
    %v354 = vpop.f32.mrf.mxu0
    %v355 = vadd.f32 %v97, %v354
    %v356 = vpop.f32.mrf.mxu0
    %v357 = vpop.f32.mrf.mxu0
    %v358 = vpop.f32.mrf.mxu0
    %359 = vdwg.mxu0
    %360 = vmatprep.subr.bf16.mxu0 0
    %361 = vmatpush1.bf16.msra.mxu0 %v279
    %362 = vmatprep.subr.bf16.mxu0 0
    %363 = vmatpush1.bf16.msra.mxu0 %v278
    %364 = vmatprep.subr.bf16.mxu0 0
    %365 = vmatpush1.bf16.msra.mxu0 %v277
    %366 = vmatprep.subr.bf16.mxu0 0
    %367 = vmatpush1.bf16.msra.mxu0 %v276
    %368 = vmatprep.subr.bf16.mxu0 0
    %369 = vmatpush1.bf16.msra.mxu0 %v275
    %370 = vmatprep.subr.bf16.mxu0 0
    %371 = vmatpush1.bf16.msra.mxu0 %v274
    %372 = vmatprep.subr.bf16.mxu0 0
    %373 = vmatpush1.bf16.msra.mxu0 %v273
    %374 = vmatprep.subr.bf16.mxu0 0
    %375 = vmatpush1.bf16.msra.mxu0 %v272
    %376 = vmatprep.subr.bf16.mxu0 0
    %377 = vmatpush2.bf16.msra.mxu0 %v287
    %378 = vmatprep.subr.bf16.mxu0 0
    %379 = vmatpush2.bf16.msra.mxu0 %v286
    %380 = vmatprep.subr.bf16.mxu0 0
    %381 = vmatpush2.bf16.msra.mxu0 %v285
    %382 = vmatprep.subr.bf16.mxu0 0
    %383 = vmatpush2.bf16.msra.mxu0 %v284
    %384 = vmatprep.subr.bf16.mxu0 0
    %385 = vmatpush2.bf16.msra.mxu0 %v283
    %386 = vmatprep.subr.bf16.mxu0 0
    %387 = vmatpush2.bf16.msra.mxu0 %v282
    %388 = vmatprep.subr.bf16.mxu0 0
    %389 = vmatpush2.bf16.msra.mxu0 %v281
    %390 = vmatprep.subr.bf16.mxu0 0
    %391 = vmatpush2.bf16.msra.mxu0 %v280
    %392 = vmatprep.mubr.bf16.mxu0 %v123
    %393 = vmatmul.mubr.bf16.gmra.mxu0 %v122
    %v394 = vpop.f32.mrf.mxu0
    %v395 = vadd.f32 %v355, %v394
    %v396 = vpop.f32.mrf.mxu0
    %v397 = vpop.f32.mrf.mxu0
    %v398 = vpop.f32.mrf.mxu0
    %399 = vdwg.mxu0
    %v400 = vpack.c.bf16 %v395, %v395
    %v401 = vld [vmem:[%s3] sm:$0xf]
    %v402 = vld [vmem:[%s3 + $0x4] sm:$0xf]
    %v403 = vld [vmem:[%s3 + $0x8] sm:$0xf]
    %v404 = vld [vmem:[%s3 + $0xc] sm:$0xf]
    %v405 = vld [vmem:[%s4] sm:$0x1]
    %v407 = vlaneseq
    %v408 = vshrl.u32 %v407, 7
    %v409 = vsub.s32 0, %v408
    %v410 = vrot.slane %v405, %v409
    %v416 = vunpack.c.l.b16 %v401
    %v417 = vunpack.c.l.b16 %v402
    %v418 = vunpack.c.l.b16 %v403
    %v419 = vunpack.c.l.b16 %v404
    %v420 = vpack.c.b16 %v417, %v416
    %v421 = vpack.c.b16 %v419, %v418
    %vm424 = vcmask 261120
    %v426 = vsel %vm424, %v400, 0
    %428 = vmatprep.subr.bf16.mxu0 0
    %429 = vmatpush1.bf16.msra.mxu0 0
    %430 = vmatprep.subr.bf16.mxu0 0
    %431 = vmatpush1.bf16.msra.mxu0 0
    %432 = vmatprep.subr.bf16.mxu0 0
    %433 = vmatpush1.bf16.msra.mxu0 0
    %434 = vmatprep.subr.bf16.mxu0 0
    %435 = vmatpush1.bf16.msra.mxu0 0
    %436 = vmatprep.subr.bf16.mxu0 0
    %437 = vmatpush1.bf16.msra.mxu0 0
    %438 = vmatprep.subr.bf16.mxu0 0
    %439 = vmatpush1.bf16.msra.mxu0 0
    %440 = vmatprep.subr.bf16.mxu0 0
    %441 = vmatpush1.bf16.msra.mxu0 %v421
    %442 = vmatprep.subr.bf16.mxu0 0
    %443 = vmatpush1.bf16.msra.mxu0 %v420
    %444 = vmatprep.subr.bf16.mxu0 0
    %445 = vmatpush2.bf16.msra.mxu0 0
    %446 = vmatprep.subr.bf16.mxu0 0
    %447 = vmatpush2.bf16.msra.mxu0 0
    %448 = vmatprep.subr.bf16.mxu0 0
    %449 = vmatpush2.bf16.msra.mxu0 0
    %450 = vmatprep.subr.bf16.mxu0 0
    %451 = vmatpush2.bf16.msra.mxu0 0
    %452 = vmatprep.subr.bf16.mxu0 0
    %453 = vmatpush2.bf16.msra.mxu0 0
    %454 = vmatprep.subr.bf16.mxu0 0
    %455 = vmatpush2.bf16.msra.mxu0 0
    %456 = vmatprep.subr.bf16.mxu0 0
    %457 = vmatpush2.bf16.msra.mxu0 0
    %458 = vmatprep.subr.bf16.mxu0 0
    %459 = vmatpush2.bf16.msra.mxu0 0
    %460 = vmatprep.mubr.bf16.mxu0 0
    %461 = vmatmul.mubr.bf16.gmra.mxu0 %v426
    %v462 = vpop.f32.mrf.mxu0
    %v463 = vadd.f32 %v410, %v462
    %v464 = vpop.f32.mrf.mxu0
    %v465 = vpop.f32.mrf.mxu0
    %v466 = vpop.f32.mrf.mxu0
    %467 = vdwg.mxu0
    %vm468 = vcmask 123904
    %469 = vst.msk [vmem:[%s6] sm:$0x3] %vm468, %v463
    %v470 = vmul.f32 %v463, 0.5
    %v471 = vmul.f32 %v470, 1.442695
    %v472 = vpow.pop %v471
    %v473 = vld [vmem:[%s5] sm:$0x3]
    %475 = vrot.lane.b32.xlu0 %v473, 8
    %v476 = vpop.permute.xlu0 %475
    %v478 = vmul.f32 %v472, %v476
    %480 = vrot.lane.b32.xlu0 %v478, 120
    %v481 = vpop.permute.xlu0 %480
    %v483 = vadd.f32 %v463, %v481
    %vm484 = vcmask 58368
    %485 = vst.msk [vmem:[#allocation2] sm:$0x3] %vm484, %v483
    // Predicated region
    $region26: #{_lambda_.5} parent=1 // pred_check
      _
    $region27: #{_lambda_.5} parent=1 // pred_check_branch
      %487 = sbr.rel (0) target = $region29
    $region28: #{_lambda_.5} parent=1 // pred_region
      _
    $region29: #{_lambda_.5} parent=1 // pred_fallthru
      _
    // Predicated region
    $region30: #{_lambda_.5} parent=1 // pred_check
      _
    $region31: #{_lambda_.5} parent=1 // pred_check_branch
      %489 = sbr.rel (0) target = $region33
    $region32: #{_lambda_.5} parent=1 // pred_region
      %s491 = ssub.s32 32, 32
      %492 = vsyncadd [#allocation3], %s491
      %s494 = sshll.u32 [#allocation2], 4
      %s495 = int_to_ptr.vmem [resolvable:$true] %s494
      %497 = dma.vmem_to_hbm [thread:$0]  %s495, 32, %s7, [#allocation3]
    $region33: #{_lambda_.5} parent=1 // pred_fallthru
      _
    // Predicated region
    $region34: #{_lambda_.5} parent=1 // pred_check
      _
    $region35: #{_lambda_.5} parent=1 // pred_check_branch
      %499 = sbr.rel (0) target = $region37
    $region36: #{_lambda_.5} parent=1 // pred_region
      _
    $region37: #{_lambda_.5} parent=1 // pred_fallthru
      _
    // Predicated region
    $region38: #{_lambda_.5} parent=1 // pred_check
      _
    $region39: #{_lambda_.5} parent=1 // pred_check_branch
      %501 = sbr.rel (0) target = $region41
    $region40: #{_lambda_.5} parent=1 // pred_region
      %502 = dma.done [#allocation3], 32
    $region41: #{_lambda_.5} parent=1 // pred_fallthru
      _
    %503 = vsyncpa [#allocation3], 1

</llo_original>
